<compile_context>
chip_gen: v5e
topology: v5e:2x2
jax: 0.10.0
libtpu: 0.0.40
codegen_flags: <defaults>
</compile_context>

<pallas_src>
import jax
import jax.numpy as jnp
from jax.experimental import pallas as pl
from jax.experimental.pallas import tpu as pltpu


def _fused_mlp_kernel(x_ref, w_ref, b_ref, o_ref):
    # Single fused GEMM (lin3(lin2(lin1(x))), no nonlinearity) + stable softmax.
    logits = jnp.dot(x_ref[...], w_ref[...],
                     preferred_element_type=jnp.float32) + b_ref[...]
    m = jnp.max(logits, axis=-1, keepdims=True)
    e = jnp.exp(logits - m)          # pad columns: exp(-1e30 - m) underflows to 0
    denom = jnp.sum(e, axis=-1, keepdims=True)
    o_ref[...] = (e / denom).astype(o_ref.dtype)


def fuse_params(params, *, lane_multiple=128):
    """Collapse lin1 -> lin2 -> lin3 (no nonlinearity) into one weight/bias.

    Exact algebra: ((x@W1+b1)@W2+b2)@W3+b3 == x@(W1@W2@W3) + ((b1@W2+b2)@W3+b3)
    TODO(synk): remove this fusion if an activation is ever inserted between layers.

    The fused weight/bias are lane-padded to a multiple of 128 output columns
    (zeros in the weight, -1e30 in the bias) so the kernel's softmax and output
    stores are lane-dense; the pad columns softmax to exactly 0 and are sliced
    off in the wrapper.
    """
    w1, b1, w2, b2, w3, b3 = params
    wc = w1 @ w2 @ w3                    # (F_in, F_out)
    bc = (b1 @ w2 + b2) @ w3 + b3        # (1, F_out)
    f_out = wc.shape[1]
    f_pad = ((f_out + lane_multiple - 1) // lane_multiple) * lane_multiple
    if f_pad != f_out:
        wc = jnp.pad(wc, ((0, 0), (0, f_pad - f_out)))
        bc = jnp.pad(bc, ((0, 0), (0, f_pad - f_out)), constant_values=-1e30)
    return wc, bc, f_out


def _pick_batch_tile(B, batch_tile, f_in, f_pad):
    """Batch-tile selection: big tiles (amortize per-step overhead), VMEM-safe,
    and >=2 grid steps for large batches so v7x's two TensorCores both get work."""
    # Cap: keep double-buffered x + out tiles under ~12 MiB (v5e scoped default 16 MiB).
    cap = (12 << 20) // (2 * 4 * (f_in + f_pad))
    cap = max(8, (cap // 8) * 8)
    tb = max(8, min((max(batch_tile, 8) // 8) * 8, cap))
    if B <= tb:
        if B >= 1024:
            # Large single-block batch: split ~in half (multiple of 8) so the
            # "parallel" batch axis can shard across 2 TCs on v7x.
            half = (((B + 1) // 2) + 7) // 8 * 8
            return min(half, tb)
        return B  # single full-array block: block dims equal full dims, no (8,128) issue
    return tb


def mlp_forward(seq, fused_params, *, batch_tile=2048):
    """Replicates MLP.forward: squeeze -> flatten -> lin1..lin3 (fused) -> softmax."""
    wc, bc, f_out = fused_params
    f_in, f_pad = wc.shape

    # np.squeeze equivalent (note: a (1, H, W) batch collapses to the
    # non-batched path and returns shape (F,), exactly like the torch code).
    seq = jnp.squeeze(seq)
    if seq.ndim > 2:
        x = seq.reshape(seq.shape[0], -1)   # torch.flatten(seq, start_dim=1)
        batched = True
    else:
        x = seq.reshape(1, -1)              # torch.flatten(seq, start_dim=0)
        batched = False

    B = x.shape[0]
    tb = _pick_batch_tile(B, batch_tile, f_in, f_pad)
    grid = (pl.cdiv(B, tb),)                # no wrapper-side pad of x: Pallas masks
                                            # the partial last block on store.

    out = pl.pallas_call(
        _fused_mlp_kernel,
        out_shape=jax.ShapeDtypeStruct((B, f_pad), jnp.float32),
        grid_spec=pltpu.PrefetchScalarGridSpec(
            num_scalar_prefetch=0,
            grid=grid,
            in_specs=[
                pl.BlockSpec((tb, f_in), lambda i: (i, 0)),      # x (batch-tiled)
                pl.BlockSpec((f_in, f_pad), lambda i: (0, 0)),   # fused weight (resident)
                pl.BlockSpec((1, f_pad), lambda i: (0, 0)),      # fused bias (resident)
            ],
            out_specs=pl.BlockSpec((tb, f_pad), lambda i: (i, 0)),
        ),
        compiler_params=pltpu.CompilerParams(
            # batch axis shards across TensorCores on v7x; harmless on v5e/v6e.
            dimension_semantics=("parallel",),
        ),
    )(x, wc, bc)

    if f_pad != f_out:
        out = out[:, :f_out]                # drop the lane-padding columns
    if not batched:
        out = out[0]
    return out


def init_params(key, board_size):
    """Deterministic init matching the layer shapes in MLP.__init__.

    PyTorch nn.Linear(in, out) has weight (out, in); we store the transpose
    (in, out) so the math is x @ W + b. Biases kept 2D (1, out) for TPU.
    """
    d_in = board_size * board_size
    k1, k2, k3, k4, k5, k6 = jax.random.split(key, 6)

    def linear(kw, kb, fan_in, fan_out):
        bound = 1.0 / jnp.sqrt(fan_in)
        w = jax.random.uniform(kw, (fan_in, fan_out), jnp.float32, -bound, bound)
        b = jax.random.uniform(kb, (1, fan_out), jnp.float32, -bound, bound)
        return w, b

    w1, b1 = linear(k1, k2, d_in, 512)
    w2, b2 = linear(k3, k4, 512, 512)
    w3, b3 = linear(k5, k6, 512, d_in)
    return (w1, b1, w2, b2, w3, b3)


def mlp_reference(seq, params):
    """Pure-JAX reference (unfused three-GEMM path) for correctness check."""
    w1, b1, w2, b2, w3, b3 = params
    seq = jnp.squeeze(seq)
    if seq.ndim > 2:
        x = seq.reshape(seq.shape[0], -1)
    else:
        x = seq.reshape(-1)
    h = x @ w1 + b1.reshape(-1)
    h = h @ w2 + b2.reshape(-1)
    logits = h @ w3 + b3.reshape(-1)
    return jax.nn.softmax(logits, axis=-1)


if __name__ == "__main__":
    # TODO(synk): nn.Dropout(p=0.1) and the train/eval loops are not part of
    # forward() (dropout is never applied there) and are intentionally omitted.
    board_size = 8            # board_size*board_size = 64 input/output features
    batch = 2

    key = jax.random.PRNGKey(0)
    k_params, k_x = jax.random.split(key)
    params = init_params(k_params, board_size)
    fused = fuse_params(params)   # done once, outside the kernel call

    # Batched input: (B, board_size, board_size)
    x = jax.random.normal(k_x, (batch, board_size, board_size), jnp.float32)
    out = jax.block_until_ready(mlp_forward(x, fused))
    ref = mlp_reference(x, params)
    assert out.shape == (batch, board_size * board_size)
    assert jnp.allclose(out, ref, atol=1e-5, rtol=1e-5)
    assert jnp.allclose(jnp.sum(out, axis=-1), jnp.ones((batch,)), atol=1e-5)

    # Tiled path with a partial last block (exercises grid=cdiv(B, tb) masking).
    xb = jax.random.normal(jax.random.PRNGKey(2), (70, board_size, board_size),
                           jnp.float32)
    outb = jax.block_until_ready(mlp_forward(xb, fused, batch_tile=32))
    refb = mlp_reference(xb, params)
    assert outb.shape == (70, board_size * board_size)
    assert jnp.allclose(outb, refb, atol=1e-5, rtol=1e-5)

    # Single-board (non-batched) path: squeeze -> flatten(start_dim=0)
    x1 = jax.random.normal(jax.random.PRNGKey(1), (board_size, board_size),
                           jnp.float32)
    out1 = jax.block_until_ready(mlp_forward(x1, fused))
    ref1 = mlp_reference(x1, params)
    assert out1.shape == (board_size * board_size,)
    assert jnp.allclose(out1, ref1, atol=1e-5, rtol=1e-5)

    print("KERNEL_OK")
</pallas_src>

<mosaic_0001>
module attributes {stable_mosaic.version = 11 : i64} {
  func.func @_fused_mlp_kernel(%arg0: i32, %arg1: memref<2x64xf32, #tpu.memory_space<vmem>>, %arg2: memref<64x128xf32, #tpu.memory_space<vmem>>, %arg3: memref<1x128xf32, #tpu.memory_space<vmem>>, %arg4: memref<2x128xf32, #tpu.memory_space<vmem>>) attributes {dimension_semantics = [#tpu.dimension_semantics<parallel>], iteration_bounds = array<i64: 1>, scalar_prefetch = 0 : i64, scratch_operands = 0 : i64, tpu.core_type = #tpu.core_type<tc>, window_params = [{transform_indices = @transform_0, window_bounds = array<i64: 2, 64>}, {pipeline_mode = #tpu.pipeline_mode<synchronous>, transform_indices = @transform_1, window_bounds = array<i64: 64, 128>}, {pipeline_mode = #tpu.pipeline_mode<synchronous>, transform_indices = @transform_2, window_bounds = array<i64: 1, 128>}, {transform_indices = @transform_3, window_bounds = array<i64: 2, 128>}]} {
    %c0 = arith.constant 0 : index
    %c0_0 = arith.constant 0 : index
    %0 = vector.load %arg1[%c0, %c0_0] : memref<2x64xf32, #tpu.memory_space<vmem>>, vector<2x64xf32>
    %c0_1 = arith.constant 0 : index
    %c0_2 = arith.constant 0 : index
    %1 = vector.load %arg2[%c0_1, %c0_2] : memref<64x128xf32, #tpu.memory_space<vmem>>, vector<64x128xf32>
    %cst = arith.constant dense<0.000000e+00> : vector<2x128xf32>
    %2 = tpu.matmul %0, %1, %cst {dimension_numbers = #tpu.dot_dimension_numbers<[1], [0], [0], [1], [0, 0, 1, 1], [], []>} : vector<2x64xf32>, vector<64x128xf32>, vector<2x128xf32> -> vector<2x128xf32>
    %c0_3 = arith.constant 0 : index
    %c0_4 = arith.constant 0 : index
    %3 = vector.load %arg3[%c0_3, %c0_4] : memref<1x128xf32, #tpu.memory_space<vmem>>, vector<1x128xf32>
    %4 = vector.broadcast %3 : vector<1x128xf32> to vector<2x128xf32>
    %5 = arith.addf %2, %4 : vector<2x128xf32>
    %cst_5 = arith.constant dense<0xFF800000> : vector<2xf32>
    %6 = vector.multi_reduction <maximumf>, %5, %cst_5 [1] : vector<2x128xf32> to vector<2xf32>
    %7 = vector.shape_cast %6 : vector<2xf32> to vector<2x1xf32>
    %8 = vector.broadcast %7 : vector<2x1xf32> to vector<2x128xf32>
    %9 = arith.subf %5, %8 : vector<2x128xf32>
    %10 = math.exp %9 : vector<2x128xf32>
    %cst_6 = arith.constant dense<0.000000e+00> : vector<2xf32>
    %11 = vector.multi_reduction <add>, %10, %cst_6 [1] : vector<2x128xf32> to vector<2xf32>
    %12 = vector.shape_cast %11 : vector<2xf32> to vector<2x1xf32>
    %13 = vector.broadcast %12 : vector<2x1xf32> to vector<2x128xf32>
    %14 = arith.divf %10, %13 : vector<2x128xf32>
    %c0_7 = arith.constant 0 : index
    %c0_8 = arith.constant 0 : index
    %15 = vector.load %arg4[%c0_7, %c0_8] : memref<2x128xf32, #tpu.memory_space<vmem>>, vector<2x128xf32>
    tpu.vector_store %arg4[%c0_7, %c0_8], %14 {strides = array<i32>} : memref<2x128xf32, #tpu.memory_space<vmem>>, vector<2x128xf32>,
    return
  }
  func.func @transform_0(%arg0: i32) -> (i32, i32) {
    %c0_i32 = arith.constant 0 : i32
    %c0_i32_0 = arith.constant 0 : i32
    return %arg0, %c0_i32 : i32, i32
  }
  func.func @transform_1(%arg0: i32) -> (i32, i32) {
    %c0_i32 = arith.constant 0 : i32
    %c0_i32_0 = arith.constant 0 : i32
    %c0_i32_1 = arith.constant 0 : i32
    return %c0_i32, %c0_i32_0 : i32, i32
  }
  func.func @transform_2(%arg0: i32) -> (i32, i32) {
    %c0_i32 = arith.constant 0 : i32
    %c0_i32_0 = arith.constant 0 : i32
    %c0_i32_1 = arith.constant 0 : i32
    return %c0_i32, %c0_i32_0 : i32, i32
  }
  func.func @transform_3(%arg0: i32) -> (i32, i32) {
    %c0_i32 = arith.constant 0 : i32
    %c0_i32_0 = arith.constant 0 : i32
    return %arg0, %c0_i32 : i32, i32
  }
}

</mosaic_0001>

<llo_original>
// kernel: tpu_custom_call.1
$region0: #{tpu_custom_call.1}
  #allocation0 [shape = 'u32[]', space=smem, size = 0x4, offset = 0x4, fixed_abs, tag = 'smem constant byte address 0x4 - core index']
  #allocation1 [shape = 'u32[72,128]{1,0:T(1,128)}', space=vmem, size = 0x9000, scoped, tag = 'internal scratch']
  %s0 = inlined_call_operand.hbm [shape: f32[2,64], index: 0, kind: input, shape index: {}]
  %s1 = inlined_call_operand.hbm [shape: f32[64,128], index: 1, kind: input, shape index: {}]
  %s2 = inlined_call_operand.vmem [shape: f32[1,128], index: 2, kind: input, shape index: {}]
  %s3 = inlined_call_operand.hbm [shape: f32[2,128], index: 3, kind: output, shape index: {}]
  %s4 = sld [smem:[#allocation0]]
  $region30: #{tpu_custom_call.1} parent=0
    _
  %s6 = ssub.s32 1, %s4
  %s7 = scalar_select 0, %s6, %s4
  $region1: #{tpu_custom_call.1} parent=0
    #allocation2 [shape = 'u8[1024]{0}', space=vmem, size = 0x400, scoped, tag = 'input window, operand 0, single buffered']
    #allocation3 [shape = 's32[1]{0}', space=sflag, size = 0x4, scoped, tag = 'scoped memory for tpu_custom_call.1']
    #allocation4 [shape = 's32[1]{0}', space=sflag, size = 0x4, scoped, tag = 'scoped memory for tpu_custom_call.1']
    #allocation5 [shape = 'u8[32768]{0}', space=vmem, size = 0x8000, scoped, tag = 'input window, operand 1, single buffered']
    #allocation6 [shape = 's32[1]{0}', space=sflag, size = 0x4, scoped, tag = 'scoped memory for tpu_custom_call.1']
    #allocation7 [shape = 'u8[1024]{0}', space=vmem, size = 0x400, scoped, tag = 'output window, operand 0, single buffered']
    %8 = vsyncpa [#allocation3], 0
    %9 = vsyncpa [#allocation6], 0
    %10 = vsyncpa [#allocation4], 0
    // Predicated region
    $region2: #{tpu_custom_call.1} parent=1 // pred_check
      _
    $region3: #{tpu_custom_call.1} parent=1 // pred_check_branch
      %12 = sbr.rel (0) target = $region5
    $region4: #{tpu_custom_call.1} parent=1 // pred_region
      %14 = vsyncadd [#allocation3], 0
      %s16 = sshll.u32 %s0, 4
      %s17 = int_to_ptr.hbm [resolvable:$true] %s16
      %s18 = sshll.u32 [#allocation2], 4
      %s19 = int_to_ptr.vmem [resolvable:$true] %s18
      %21 = dma.hbm_to_vmem [thread:$0]  %s17, 32, %s19, [#allocation3]
    $region5: #{tpu_custom_call.1} parent=1 // pred_fallthru
      _
    // Predicated region
    $region6: #{tpu_custom_call.1} parent=1 // pred_check
      _
    $region7: #{tpu_custom_call.1} parent=1 // pred_check_branch
      %23 = sbr.rel (0) target = $region9
    $region8: #{tpu_custom_call.1} parent=1 // pred_region
      %25 = vsyncadd [#allocation6], 0
      %s26 = sshll.u32 %s1, 4
      %s27 = int_to_ptr.hbm [resolvable:$true] %s26
      %s28 = sshll.u32 [#allocation5], 4
      %s29 = int_to_ptr.vmem [resolvable:$true] %s28
      %34 = dma.hbm_to_vmem [thread:$0]  %s27, 1024, %s29, [#allocation6], 128, 128, 8
    $region9: #{tpu_custom_call.1} parent=1 // pred_fallthru
      _
    // Predicated region
    $region10: #{tpu_custom_call.1} parent=1 // pred_check
      _
    $region11: #{tpu_custom_call.1} parent=1 // pred_check_branch
      %36 = sbr.rel (0) target = $region13
    $region12: #{tpu_custom_call.1} parent=1 // pred_region
      _
    $region13: #{tpu_custom_call.1} parent=1 // pred_fallthru
      _
    // Predicated region
    $region14: #{tpu_custom_call.1} parent=1 // pred_check
      _
    $region15: #{tpu_custom_call.1} parent=1 // pred_check_branch
      %38 = sbr.rel (0) target = $region17
    $region16: #{tpu_custom_call.1} parent=1 // pred_region
      %40 = dma.done [#allocation3], 32
    $region17: #{tpu_custom_call.1} parent=1 // pred_fallthru
      _
    // Predicated region
    $region18: #{tpu_custom_call.1} parent=1 // pred_check
      _
    $region19: #{tpu_custom_call.1} parent=1 // pred_check_branch
      %42 = sbr.rel (0) target = $region21
    $region20: #{tpu_custom_call.1} parent=1 // pred_region
      %44 = dma.done [#allocation6], 1024
    $region21: #{tpu_custom_call.1} parent=1 // pred_fallthru
      _
    %v45 = vld [vmem:[#allocation2] sm:$0x3]
    %v46 = vld [vmem:[#allocation5] sm:$0xff]
    %v47 = vld [vmem:[#allocation5 + $0x8] sm:$0xff]
    %v48 = vld [vmem:[#allocation5 + $0x10] sm:$0xff]
    %v49 = vld [vmem:[#allocation5 + $0x18] sm:$0xff]
    %v50 = vld [vmem:[#allocation5 + $0x20] sm:$0xff]
    %v51 = vld [vmem:[#allocation5 + $0x28] sm:$0xff]
    %v52 = vld [vmem:[#allocation5 + $0x30] sm:$0xff]
    %v53 = vld [vmem:[#allocation5 + $0x38] sm:$0xff]
    %v54 = vld [vmem:[%s2] sm:$0x1]
    %v56 = vperm.slane %v54, 0
    %vm58 = vcmask 523264
    %v60 = vsel %vm58, %v45, 0
    %62 = vmatpush.msra.mxu0 0.0
    %63 = vmatpush.msra.mxu0 0.0
    %64 = vmatpush.msra.mxu0 0.0
    %65 = vmatpush.msra.mxu0 0.0
    %66 = vmatpush.msra.mxu0 0.0
    %67 = vmatpush.msra.mxu0 0.0
    %68 = vmatpush.msra.mxu0 0.0
    %69 = vmatpush.msra.mxu0 0.0
    %70 = vmatpush.msra.mxu0 %v53
    %71 = vmatpush.msra.mxu0 %v52
    %72 = vmatpush.msra.mxu0 %v51
    %73 = vmatpush.msra.mxu0 %v50
    %74 = vmatpush.msra.mxu0 %v49
    %75 = vmatpush.msra.mxu0 %v48
    %76 = vmatpush.msra.mxu0 %v47
    %77 = vmatpush.msra.mxu0 %v46
    %78 = vmatmul.f32.gmra.mxu0 %v60
    %v79 = vpop.f32.mrf.mxu0
    %v80 = vadd.f32 %v56, %v79
    %81 = vdwg.mxu0
    %vm82 = vcmask 1041408
    %v83 = vsel %vm82, %v80, -inf
    %84 = vmax.xlane.f32.xlu0 %v83
    %v85 = vpop.xlane.xlu0 %84
    %v86 = vsub.f32 %v80, %v85
    %v87 = vmul.f32 %v86, 1.442695
    %v88 = vpow.pop %v87
    %v89 = vsel %vm82, %v88, 0.0
    %90 = vadd.xlane.f32.xlu0 %v89
    %v91 = vpop.xlane.xlu0 %90
    %v92 = vrcp.pop %v91
    %v93 = vmul.f32 %v91, %v92
    %v94 = vsub.f32 1.0, %v93
    %v95 = vmul.f32 %v92, %v94
    %v96 = vadd.f32 %v92, %v95
    %vm97 = vweird.f32 %v91
    %vm98 = vweird.f32 %v92
    %vm99 = vmor %vm97, %vm98
    %v100 = vsel %vm99, %v92, %v96
    %v101 = vand.u32 2147483647, %v91
    %vm102 = vcmp.eq.f32.partialorder %v101, 8.507059e+37
    %v103 = vand.u32 %v91, 2147483648
    %v104 = vor.u32 1.1754944e-38, %v103
    %v105 = vsel %vm102, %v104, %v100
    %v106 = vmul.f32 %v88, %v105
    %107 = vst [vmem:[#allocation7] sm:$0x3] %v106
    // Predicated region
    $region22: #{tpu_custom_call.1} parent=1 // pred_check
      _
    $region23: #{tpu_custom_call.1} parent=1 // pred_check_branch
      %109 = sbr.rel (0) target = $region25
    $region24: #{tpu_custom_call.1} parent=1 // pred_region
      %111 = vsyncadd [#allocation4], 0
      %s113 = sshll.u32 [#allocation7], 4
      %s114 = int_to_ptr.vmem [resolvable:$true] %s113
      %s115 = sshll.u32 %s3, 4
      %s116 = int_to_ptr.hbm [resolvable:$true] %s115
      %118 = dma.vmem_to_hbm [thread:$0]  %s114, 32, %s116, [#allocation4]
    $region25: #{tpu_custom_call.1} parent=1 // pred_fallthru
      _
    // Predicated region
    $region26: #{tpu_custom_call.1} parent=1 // pred_check
      _
    $region27: #{tpu_custom_call.1} parent=1 // pred_check_branch
      %120 = sbr.rel (0) target = $region29
    $region28: #{tpu_custom_call.1} parent=1 // pred_region
      %122 = dma.done [#allocation4], 32
    $region29: #{tpu_custom_call.1} parent=1 // pred_fallthru
      _
    %123 = vsyncpa [#allocation3], 1
    %124 = vsyncpa [#allocation6], 1
    %125 = vsyncpa [#allocation4], 1

</llo_original>
